<compile_context>
chip_gen: v7x
topology: tpu7x:2x2x1
jax: 0.10.0
libtpu: 0.0.40
codegen_flags: <defaults>
</compile_context>

<pallas_src>
import math

import numpy as np
import jax
import jax.numpy as jnp
from jax.experimental import pallas as pl
from jax.experimental.pallas import tpu as pltpu


# ----------------------------------------------------------------------------
# DCT filter construction (faithful to MultiSpectralDCTLayer / get_freq_indices)
# ----------------------------------------------------------------------------

def get_freq_indices(method):
    # Only the 'top*' branch of the reference is runnable (the 'low'/'bot' branches
    # never define mapper_z), so that is what we support.
    assert method in ['top1', 'top2', 'top4', 'top8', 'top16', 'top32']
    num_freq = int(method[3:])
    all_top_indices_x = [0, 0, 6, 0, 0, 1, 1, 4, 5, 1, 3, 0, 0, 0, 3, 2,
                         4, 6, 3, 5, 5, 2, 6, 5, 5, 3, 3, 4, 2, 2, 6, 1]
    all_top_indices_y = [0, 1, 0, 5, 2, 0, 2, 0, 0, 6, 0, 4, 6, 3, 5, 2,
                         6, 3, 3, 3, 5, 1, 1, 2, 4, 2, 1, 1, 3, 0, 5, 3]
    all_top_indices_z = [0, 0, 0, 0]
    return (all_top_indices_x[:num_freq],
            all_top_indices_y[:num_freq],
            all_top_indices_z[:num_freq])


def _build_filter(pos, freq, POS):
    result = math.cos(math.pi * freq * (pos + 0.5) / POS) / math.sqrt(POS)
    return result if freq == 0 else result * math.sqrt(2)


def get_dct_filter(tile_x, tile_y, tile_z, mapper_x, mapper_y, mapper_z, channel):
    """Returns (basis, dct_filter):
       basis      (G, X*Y*Z)  -- the num_freq DISTINCT filter rows (deduplicated)
       dct_filter (C, X, Y, Z)-- the full per-channel filter (reference / checking)"""
    assert len(mapper_x) == len(mapper_y) == len(mapper_z)
    assert channel % len(mapper_x) == 0
    num_freq = len(mapper_x)
    basis = np.zeros((num_freq, tile_x, tile_y, tile_z), np.float32)
    for i, (u_x, v_y, w_z) in enumerate(zip(mapper_x, mapper_y, mapper_z)):
        bx = np.array([_build_filter(t, u_x, tile_x) for t in range(tile_x)], np.float32)
        by = np.array([_build_filter(t, v_y, tile_y) for t in range(tile_y)], np.float32)
        bz = np.array([_build_filter(t, w_z, tile_z) for t in range(tile_z)], np.float32)
        basis[i] = bx[:, None, None] * by[None, :, None] * bz[None, None, :]
    c_part = channel // num_freq
    dct_filter = np.repeat(basis, c_part, axis=0)              # (C, X, Y, Z)
    return basis.reshape(num_freq, -1), dct_filter


def build_msa_params(channel, dct_h, dct_w, dct_d, reduction=4,
                     freq_sel_method='top4', seed=0):
    mapper_x, mapper_y, mapper_z = get_freq_indices(freq_sel_method)
    mapper_x = [t * (dct_h // 8) for t in mapper_x]
    mapper_y = [t * (dct_w // 8) for t in mapper_y]
    mapper_z = [t * (dct_d // 8) for t in mapper_z]
    basis, dct_filter = get_dct_filter(dct_h, dct_w, dct_d,
                                       mapper_x, mapper_y, mapper_z, channel)

    rng = np.random.RandomState(seed)
    cr = channel // reduction
    bound1 = 1.0 / math.sqrt(channel)
    w1 = rng.uniform(-bound1, bound1, size=(cr, channel)).astype(np.float32)   # fc1 (out,in)
    bound2 = 1.0 / math.sqrt(cr)
    w2 = rng.uniform(-bound2, bound2, size=(channel, cr)).astype(np.float32)   # fc2 (out,in)

    return {
        # layer-style parameters (used by the pure-JAX reference)
        'dct_filter': jnp.asarray(dct_filter),                       # (C, dct_h, dct_w, dct_d)
        'w1': jnp.asarray(w1),                                       # (C//r, C)
        'w2': jnp.asarray(w2),                                       # (C, C//r)
        # kernel-ready parameters (dedup / transpose hoisted out of the hot path)
        'dct_basis': jnp.asarray(basis),                             # (G, S) deduplicated
        'w1t': jnp.asarray(np.ascontiguousarray(w1.T)),              # (C, C//r)
    }


# ----------------------------------------------------------------------------
# Tiling heuristics
# ----------------------------------------------------------------------------

def _pick_chunk(s, max_chunk=512):
    """Largest lane chunk (multiple of 128, <= max_chunk) dividing S."""
    c = min(max_chunk, s)
    while c > 128 and s % c:
        c -= 128
    return c if s % c == 0 else s


def _pick_batch_tile(n, per_elem_bytes, target_bytes=2 << 20, max_bytes=8 << 20):
    """Pack batch elements per grid step: aim for >= ~2 MiB tiles (HBM roofline knee),
    cap the block at ~8 MiB, and keep >= 2 grid steps when n >= 2 (v7x megacore)."""
    best = 1
    for bt in range(1, n + 1):
        if n % bt:
            continue
        if bt > 1 and (bt * per_elem_bytes > max_bytes or n // bt < 2):
            break
        best = bt
        if bt * per_elem_bytes >= target_bytes:
            break
    return best


# ----------------------------------------------------------------------------
# Fused Pallas kernel: DCT pooling + fc1/ReLU/fc2/sigmoid + channel rescale
# ----------------------------------------------------------------------------

def _msa_fused_kernel(x_ref, basis_ref, w1t_ref, w2_ref, o_ref, y_scr):
    """One grid step = `bt` batch elements.

    x_ref, o_ref : (bt, C, S)  I/O dtype (f32 or bf16), S on the lane axis
    basis_ref    : (G, S)      f32, deduplicated DCT basis (one row per frequency)
    w1t_ref      : (C, Cr)     f32, fc1 weight transposed (w1t[c, j] = w1[j, c])
    w2_ref       : (C, Cr)     f32, fc2 weight            (w2[c, j])
    y_scr        : (bt, C, 1)  f32 scratch for the pooled per-channel values
    """
    bt, C, S = x_ref.shape
    G = basis_ref.shape[0]
    c_part = C // G
    chunk = _pick_chunk(S)
    n_chunks = S // chunk

    # ---- 1) DCT-weighted global spatial reduction ------------------------------
    # y[b, c] = sum_s x[b, c, s] * basis[c // c_part, s]
    # Grouped over channels (filter dedup) and chunked over lanes, so no full-block
    # temporary is materialised; accumulation is f32 regardless of the I/O dtype.
    for g in range(G):                                  # static, tiny (num_freq)
        lo, hi = g * c_part, (g + 1) * c_part

        def chunk_body(i, acc):
            start = pl.multiple_of(i * chunk, chunk)
            xg = x_ref[:, lo:hi, pl.ds(start, chunk)].astype(jnp.float32)  # (bt,c_part,chunk)
            bg = basis_ref[g:g + 1, pl.ds(start, chunk)]                   # (1, chunk)
            return acc + jnp.sum(xg * bg, axis=-1, keepdims=True)          # (bt,c_part,1)

        y_g = jax.lax.fori_loop(0, n_chunks, chunk_body,
                                jnp.zeros((bt, c_part, 1), jnp.float32))
        y_scr[:, lo:hi, :] = y_g

    y = y_scr[...]                                                          # (bt, C, 1)

    # ---- 2) fc1 -> ReLU -> fc2 -> sigmoid (bias-free; tiny, stays off the MXU) --
    w1t = w1t_ref[...].astype(jnp.float32)                                  # (C, Cr)
    w2 = w2_ref[...].astype(jnp.float32)                                    # (C, Cr)
    h = jnp.sum(w1t * y, axis=1, keepdims=True)       # sublane reduce -> (bt, 1, Cr)
    h = jnp.maximum(h, 0.0)
    z = jnp.sum(w2 * h, axis=2, keepdims=True)        # lane reduce    -> (bt, C, 1)
    s = jax.nn.sigmoid(z)                             # overflow-safe sigmoid (EUP exp)

    # ---- 3) epilogue: per-channel rescale of x, chunked (VMEM re-read only) -----
    def store_body(i, carry):
        start = pl.multiple_of(i * chunk, chunk)
        xc = x_ref[:, :, pl.ds(start, chunk)].astype(jnp.float32)           # (bt,C,chunk)
        o_ref[:, :, pl.ds(start, chunk)] = (xc * s).astype(o_ref.dtype)
        return carry

    jax.lax.fori_loop(0, n_chunks, store_body, 0)


def msa_forward(x, dct_basis, w1t, w2, *, donate_x=False):
    """MultiSpectralAttentionLayer.forward.

    x         : (N, C, H, W, D) float32 or bfloat16 (NCDHW)
    dct_basis : (G, H*W*D) f32 -- the num_freq distinct DCT filter rows (deduplicated)
    w1t       : (C, C//r) f32  -- fc1 weight transposed
    w2        : (C, C//r) f32  -- fc2 weight
    """
    N, C, H, W, D = x.shape
    S = H * W * D
    G, S_basis = dct_basis.shape
    Cr = w1t.shape[1]

    # Only the no-pooling path (spatial size == DCT filter size) is a faithful
    # implementation: the reference's adaptive_avg_pool3d((dct_h, dct_w)) call passes a
    # 2-tuple to a 3-D pool and raises in PyTorch, so it is not runnable as written.
    # TODO(synk): add an average-pooling prologue if the module is ever fixed upstream.
    assert S_basis == S, "spatial size must match the DCT filter size (no-pool path)"
    assert C % G == 0 and w1t.shape == (C, Cr) and w2.shape == (C, Cr)
    # Lane-dense layout requirement: S (lane axis) must be a multiple of 128, otherwise
    # stores degrade to masked partial vst (pad on the caller side if needed).
    assert S % 128 == 0, "H*W*D must be a multiple of 128"

    x_flat = x.reshape(N, C, S)                        # S on lanes, C on sublanes
    itemsize = x_flat.dtype.itemsize
    bt = _pick_batch_tile(N, C * S * itemsize)
    grid = (N // bt,)

    # Explicit VMEM budget: x + out double-buffered blocks, (double-buffered) constants,
    # plus slack for the bounded lane-chunk temporaries.  Capped at v7x's 64 MiB.
    block_bytes = bt * C * S * itemsize
    const_bytes = (G * S + 2 * C * Cr) * 4
    vmem_limit = int(min(max(4 * block_bytes + 2 * const_bytes + (4 << 20), 16 << 20),
                         64 << 20))

    kwargs = {}
    if donate_x:
        # Opt-in: only profitable when the caller actually donates x's HBM buffer;
        # otherwise XLA inserts a defensive copy around the custom call.
        kwargs["input_output_aliases"] = {0: 0}

    out = pl.pallas_call(
        _msa_fused_kernel,
        out_shape=jax.ShapeDtypeStruct((N, C, S), x_flat.dtype),
        grid_spec=pltpu.PrefetchScalarGridSpec(
            num_scalar_prefetch=0,
            grid=grid,
            in_specs=[
                pl.BlockSpec((bt, C, S), lambda n: (n, 0, 0)),   # per-step x tile
                pl.BlockSpec((G, S), lambda n: (0, 0)),          # DCT basis (resident)
                pl.BlockSpec((C, Cr), lambda n: (0, 0)),         # fc1^T     (resident)
                pl.BlockSpec((C, Cr), lambda n: (0, 0)),         # fc2       (resident)
            ],
            out_specs=pl.BlockSpec((bt, C, S), lambda n: (n, 0, 0)),
            scratch_shapes=[pltpu.VMEM((bt, C, 1), jnp.float32)],
        ),
        compiler_params=pltpu.CompilerParams(
            dimension_semantics=("parallel",),                    # batch across TCs (v7x)
            vmem_limit_bytes=vmem_limit),
        **kwargs,
    )(x_flat, dct_basis, w1t, w2)

    return out.reshape(N, C, H, W, D)


# ----------------------------------------------------------------------------
# Pure-JAX reference (mirrors the PyTorch module) for correctness checking
# ----------------------------------------------------------------------------

def msa_reference(x, params):
    y = jnp.sum(x * params['dct_filter'][None], axis=(2, 3, 4))      # (N, C)
    h = jnp.maximum(y @ params['w1'].T, 0.0)
    s = jax.nn.sigmoid(h @ params['w2'].T)
    return x * s[:, :, None, None, None]


# ----------------------------------------------------------------------------
# Demo
# ----------------------------------------------------------------------------

if __name__ == "__main__":
    N, C, H, W, D = 2, 32, 16, 16, 16
    params = build_msa_params(channel=C, dct_h=H, dct_w=W, dct_d=D,
                              reduction=4, freq_sel_method='top4', seed=0)

    key = jax.random.PRNGKey(0)
    x = jax.random.normal(key, (N, C, H, W, D), dtype=jnp.float32)

    fwd = jax.jit(msa_forward)

    # f32 I/O path (reference-accurate)
    out = jax.block_until_ready(
        fwd(x, params['dct_basis'], params['w1t'], params['w2']))
    ref = msa_reference(x, params)
    assert out.shape == (N, C, H, W, D)
    assert bool(jnp.all(jnp.isfinite(out)))
    assert bool(jnp.allclose(out, ref, rtol=1e-4, atol=1e-4)), (
        "f32 max abs err %e" % float(jnp.max(jnp.abs(out - ref))))

    # bf16 I/O variant (halves HBM traffic of this HBM-bound layer; f32 accumulation)
    out_bf16 = jax.block_until_ready(
        fwd(x.astype(jnp.bfloat16), params['dct_basis'], params['w1t'], params['w2']))
    assert out_bf16.dtype == jnp.bfloat16
    err_bf16 = jnp.max(jnp.abs(out_bf16.astype(jnp.float32) - ref))
    assert bool(jnp.allclose(out_bf16.astype(jnp.float32), ref, rtol=2e-2, atol=2e-2)), (
        "bf16 max abs err %e" % float(err_bf16))

    print("KERNEL_OK")
</pallas_src>

<mosaic_0001>
module attributes {stable_mosaic.version = 11 : i64} {
  func.func @_msa_fused_kernel(%arg0: i32, %arg1: memref<1x32x4096xf32, #tpu.memory_space<vmem>>, %arg2: memref<4x4096xf32, #tpu.memory_space<vmem>>, %arg3: memref<32x8xf32, #tpu.memory_space<vmem>>, %arg4: memref<32x8xf32, #tpu.memory_space<vmem>>, %arg5: memref<1x32x4096xf32, #tpu.memory_space<vmem>>, %arg6: memref<1x32x1xf32, #tpu.memory_space<vmem>>) attributes {dimension_semantics = [#tpu.dimension_semantics<parallel>], iteration_bounds = array<i64: 2>, scalar_prefetch = 0 : i64, scratch_operands = 1 : i64, tpu.core_type = #tpu.core_type<tc>, window_params = [{transform_indices = @transform_0, window_bounds = array<i64: 1, 32, 4096>}, {pipeline_mode = #tpu.pipeline_mode<synchronous>, transform_indices = @transform_1, window_bounds = array<i64: 4, 4096>}, {pipeline_mode = #tpu.pipeline_mode<synchronous>, transform_indices = @transform_2, window_bounds = array<i64: 32, 8>}, {pipeline_mode = #tpu.pipeline_mode<synchronous>, transform_indices = @transform_3, window_bounds = array<i64: 32, 8>}, {transform_indices = @transform_4, window_bounds = array<i64: 1, 32, 4096>}]} {
    %cst = arith.constant 0.000000e+00 : f32
    %0 = vector.broadcast %cst : f32 to vector<1x8x1xf32>
    %c0_i32 = arith.constant 0 : i32
    %c8_i32 = arith.constant 8 : i32
    %1 = arith.addi %c0_i32, %c8_i32 : i32
    %c1_i32 = arith.constant 1 : i32
    %2 = scf.for %arg7 = %c0_i32 to %1 step %c1_i32 iter_args(%arg8 = %0) -> (vector<1x8x1xf32>)  : i32 {
      %c512_i32 = arith.constant 512 : i32
      %37 = arith.muli %arg7, %c512_i32 : i32
      %38 = tpu.assume_multiple %37, 512 : i32
      %c0_39 = arith.constant 0 : index
      %c0_40 = arith.constant 0 : index
      %39 = arith.index_cast %38 : i32 to index
      %40 = vector.load %arg1[%c0_39, %c0_40, %39] : memref<1x32x4096xf32, #tpu.memory_space<vmem>>, vector<1x8x512xf32>
      %c0_41 = arith.constant 0 : index
      %41 = arith.index_cast %38 : i32 to index
      %42 = vector.load %arg2[%c0_41, %41] : memref<4x4096xf32, #tpu.memory_space<vmem>>, vector<1x512xf32>
      %43 = vector.shape_cast %42 : vector<1x512xf32> to vector<1x1x512xf32>
      %44 = vector.broadcast %43 : vector<1x1x512xf32> to vector<1x8x512xf32>
      %45 = arith.mulf %40, %44 : vector<1x8x512xf32>
      %cst_42 = arith.constant dense<0.000000e+00> : vector<1x8xf32>
      %46 = vector.multi_reduction <add>, %45, %cst_42 [2] : vector<1x8x512xf32> to vector<1x8xf32>
      %47 = vector.shape_cast %46 : vector<1x8xf32> to vector<1x8x1xf32>
      %48 = arith.addf %arg8, %47 : vector<1x8x1xf32>
      scf.yield %48 : vector<1x8x1xf32>
    }
    %c8_i32_0 = arith.constant 8 : i32
    %c0 = arith.constant 0 : index
    %c0_1 = arith.constant 0 : index
    %c0_2 = arith.constant 0 : index
    %3 = vector.load %arg6[%c0, %c0_1, %c0_2] : memref<1x32x1xf32, #tpu.memory_space<vmem>>, vector<1x8x1xf32>
    tpu.vector_store %arg6[%c0, %c0_1, %c0_2], %2 {strides = array<i32>} : memref<1x32x1xf32, #tpu.memory_space<vmem>>, vector<1x8x1xf32>,
    %cst_3 = arith.constant 0.000000e+00 : f32
    %4 = vector.broadcast %cst_3 : f32 to vector<1x8x1xf32>
    %c0_i32_4 = arith.constant 0 : i32
    %c8_i32_5 = arith.constant 8 : i32
    %5 = arith.addi %c0_i32_4, %c8_i32_5 : i32
    %c1_i32_6 = arith.constant 1 : i32
    %6 = scf.for %arg7 = %c0_i32_4 to %5 step %c1_i32_6 iter_args(%arg8 = %4) -> (vector<1x8x1xf32>)  : i32 {
      %c512_i32 = arith.constant 512 : i32
      %37 = arith.muli %arg7, %c512_i32 : i32
      %38 = tpu.assume_multiple %37, 512 : i32
      %c0_39 = arith.constant 0 : index
      %c8_40 = arith.constant 8 : index
      %39 = arith.index_cast %38 : i32 to index
      %40 = vector.load %arg1[%c0_39, %c8_40, %39] : memref<1x32x4096xf32, #tpu.memory_space<vmem>>, vector<1x8x512xf32>
      %c1 = arith.constant 1 : index
      %41 = arith.index_cast %38 : i32 to index
      %42 = vector.load %arg2[%c1, %41] : memref<4x4096xf32, #tpu.memory_space<vmem>>, vector<1x512xf32>
      %43 = vector.shape_cast %42 : vector<1x512xf32> to vector<1x1x512xf32>
      %44 = vector.broadcast %43 : vector<1x1x512xf32> to vector<1x8x512xf32>
      %45 = arith.mulf %40, %44 : vector<1x8x512xf32>
      %cst_41 = arith.constant dense<0.000000e+00> : vector<1x8xf32>
      %46 = vector.multi_reduction <add>, %45, %cst_41 [2] : vector<1x8x512xf32> to vector<1x8xf32>
      %47 = vector.shape_cast %46 : vector<1x8xf32> to vector<1x8x1xf32>
      %48 = arith.addf %arg8, %47 : vector<1x8x1xf32>
      scf.yield %48 : vector<1x8x1xf32>
    }
    %c8_i32_7 = arith.constant 8 : i32
    %c0_8 = arith.constant 0 : index
    %c8 = arith.constant 8 : index
    %c0_9 = arith.constant 0 : index
    %7 = vector.load %arg6[%c0_8, %c8, %c0_9] : memref<1x32x1xf32, #tpu.memory_space<vmem>>, vector<1x8x1xf32>
    tpu.vector_store %arg6[%c0_8, %c8, %c0_9], %6 {strides = array<i32>} : memref<1x32x1xf32, #tpu.memory_space<vmem>>, vector<1x8x1xf32>,
    %cst_10 = arith.constant 0.000000e+00 : f32
    %8 = vector.broadcast %cst_10 : f32 to vector<1x8x1xf32>
    %c0_i32_11 = arith.constant 0 : i32
    %c8_i32_12 = arith.constant 8 : i32
    %9 = arith.addi %c0_i32_11, %c8_i32_12 : i32
    %c1_i32_13 = arith.constant 1 : i32
    %10 = scf.for %arg7 = %c0_i32_11 to %9 step %c1_i32_13 iter_args(%arg8 = %8) -> (vector<1x8x1xf32>)  : i32 {
      %c512_i32 = arith.constant 512 : i32
      %37 = arith.muli %arg7, %c512_i32 : i32
      %38 = tpu.assume_multiple %37, 512 : i32
      %c0_39 = arith.constant 0 : index
      %c16_40 = arith.constant 16 : index
      %39 = arith.index_cast %38 : i32 to index
      %40 = vector.load %arg1[%c0_39, %c16_40, %39] : memref<1x32x4096xf32, #tpu.memory_space<vmem>>, vector<1x8x512xf32>
      %c2 = arith.constant 2 : index
      %41 = arith.index_cast %38 : i32 to index
      %42 = vector.load %arg2[%c2, %41] : memref<4x4096xf32, #tpu.memory_space<vmem>>, vector<1x512xf32>
      %43 = vector.shape_cast %42 : vector<1x512xf32> to vector<1x1x512xf32>
      %44 = vector.broadcast %43 : vector<1x1x512xf32> to vector<1x8x512xf32>
      %45 = arith.mulf %40, %44 : vector<1x8x512xf32>
      %cst_41 = arith.constant dense<0.000000e+00> : vector<1x8xf32>
      %46 = vector.multi_reduction <add>, %45, %cst_41 [2] : vector<1x8x512xf32> to vector<1x8xf32>
      %47 = vector.shape_cast %46 : vector<1x8xf32> to vector<1x8x1xf32>
      %48 = arith.addf %arg8, %47 : vector<1x8x1xf32>
      scf.yield %48 : vector<1x8x1xf32>
    }
    %c8_i32_14 = arith.constant 8 : i32
    %c0_15 = arith.constant 0 : index
    %c16 = arith.constant 16 : index
    %c0_16 = arith.constant 0 : index
    %11 = vector.load %arg6[%c0_15, %c16, %c0_16] : memref<1x32x1xf32, #tpu.memory_space<vmem>>, vector<1x8x1xf32>
    tpu.vector_store %arg6[%c0_15, %c16, %c0_16], %10 {strides = array<i32>} : memref<1x32x1xf32, #tpu.memory_space<vmem>>, vector<1x8x1xf32>,
    %cst_17 = arith.constant 0.000000e+00 : f32
    %12 = vector.broadcast %cst_17 : f32 to vector<1x8x1xf32>
    %c0_i32_18 = arith.constant 0 : i32
    %c8_i32_19 = arith.constant 8 : i32
    %13 = arith.addi %c0_i32_18, %c8_i32_19 : i32
    %c1_i32_20 = arith.constant 1 : i32
    %14 = scf.for %arg7 = %c0_i32_18 to %13 step %c1_i32_20 iter_args(%arg8 = %12) -> (vector<1x8x1xf32>)  : i32 {
      %c512_i32 = arith.constant 512 : i32
      %37 = arith.muli %arg7, %c512_i32 : i32
      %38 = tpu.assume_multiple %37, 512 : i32
      %c0_39 = arith.constant 0 : index
      %c24_40 = arith.constant 24 : index
      %39 = arith.index_cast %38 : i32 to index
      %40 = vector.load %arg1[%c0_39, %c24_40, %39] : memref<1x32x4096xf32, #tpu.memory_space<vmem>>, vector<1x8x512xf32>
      %c3 = arith.constant 3 : index
      %41 = arith.index_cast %38 : i32 to index
      %42 = vector.load %arg2[%c3, %41] : memref<4x4096xf32, #tpu.memory_space<vmem>>, vector<1x512xf32>
      %43 = vector.shape_cast %42 : vector<1x512xf32> to vector<1x1x512xf32>
      %44 = vector.broadcast %43 : vector<1x1x512xf32> to vector<1x8x512xf32>
      %45 = arith.mulf %40, %44 : vector<1x8x512xf32>
      %cst_41 = arith.constant dense<0.000000e+00> : vector<1x8xf32>
      %46 = vector.multi_reduction <add>, %45, %cst_41 [2] : vector<1x8x512xf32> to vector<1x8xf32>
      %47 = vector.shape_cast %46 : vector<1x8xf32> to vector<1x8x1xf32>
      %48 = arith.addf %arg8, %47 : vector<1x8x1xf32>
      scf.yield %48 : vector<1x8x1xf32>
    }
    %c8_i32_21 = arith.constant 8 : i32
    %c0_22 = arith.constant 0 : index
    %c24 = arith.constant 24 : index
    %c0_23 = arith.constant 0 : index
    %15 = vector.load %arg6[%c0_22, %c24, %c0_23] : memref<1x32x1xf32, #tpu.memory_space<vmem>>, vector<1x8x1xf32>
    tpu.vector_store %arg6[%c0_22, %c24, %c0_23], %14 {strides = array<i32>} : memref<1x32x1xf32, #tpu.memory_space<vmem>>, vector<1x8x1xf32>,
    %c0_24 = arith.constant 0 : index
    %c0_25 = arith.constant 0 : index
    %c0_26 = arith.constant 0 : index
    %16 = vector.load %arg6[%c0_24, %c0_25, %c0_26] : memref<1x32x1xf32, #tpu.memory_space<vmem>>, vector<1x32x1xf32>
    %c0_27 = arith.constant 0 : index
    %c0_28 = arith.constant 0 : index
    %17 = vector.load %arg3[%c0_27, %c0_28] : memref<32x8xf32, #tpu.memory_space<vmem>>, vector<32x8xf32>
    %c0_29 = arith.constant 0 : index
    %c0_30 = arith.constant 0 : index
    %18 = vector.load %arg4[%c0_29, %c0_30] : memref<32x8xf32, #tpu.memory_space<vmem>>, vector<32x8xf32>
    %19 = vector.shape_cast %17 : vector<32x8xf32> to vector<1x32x8xf32>
    %20 = vector.broadcast %16 : vector<1x32x1xf32> to vector<1x32x8xf32>
    %21 = arith.mulf %19, %20 : vector<1x32x8xf32>
    %cst_31 = arith.constant dense<0.000000e+00> : vector<1x8xf32>
    %22 = vector.multi_reduction <add>, %21, %cst_31 [1] : vector<1x32x8xf32> to vector<1x8xf32>
    %23 = vector.shape_cast %22 : vector<1x8xf32> to vector<1x1x8xf32>
    %cst_32 = arith.constant 0.000000e+00 : f32
    %24 = vector.broadcast %cst_32 : f32 to vector<1x1x8xf32>
    %25 = arith.maximumf %23, %24 : vector<1x1x8xf32>
    %26 = vector.shape_cast %18 : vector<32x8xf32> to vector<1x32x8xf32>
    %27 = vector.broadcast %25 : vector<1x1x8xf32> to vector<1x32x8xf32>
    %28 = arith.mulf %26, %27 : vector<1x32x8xf32>
    %cst_33 = arith.constant dense<0.000000e+00> : vector<1x32xf32>
    %29 = vector.multi_reduction <add>, %28, %cst_33 [2] : vector<1x32x8xf32> to vector<1x32xf32>
    %30 = vector.shape_cast %29 : vector<1x32xf32> to vector<1x32x1xf32>
    %31 = arith.negf %30 : vector<1x32x1xf32>
    %32 = math.exp %31 : vector<1x32x1xf32>
    %cst_34 = arith.constant 1.000000e+00 : f32
    %33 = vector.broadcast %cst_34 : f32 to vector<1x32x1xf32>
    %34 = arith.addf %33, %32 : vector<1x32x1xf32>
    %35 = arith.divf %33, %34 : vector<1x32x1xf32>
    %c0_i32_35 = arith.constant 0 : i32
    %c8_i32_36 = arith.constant 8 : i32
    %36 = arith.addi %c0_i32_35, %c8_i32_36 : i32
    %c1_i32_37 = arith.constant 1 : i32
    scf.for %arg7 = %c0_i32_35 to %36 step %c1_i32_37  : i32 {
      %c512_i32 = arith.constant 512 : i32
      %37 = arith.muli %arg7, %c512_i32 : i32
      %38 = tpu.assume_multiple %37, 512 : i32
      %c0_39 = arith.constant 0 : index
      %c0_40 = arith.constant 0 : index
      %39 = arith.index_cast %38 : i32 to index
      %40 = vector.load %arg1[%c0_39, %c0_40, %39] : memref<1x32x4096xf32, #tpu.memory_space<vmem>>, vector<1x32x512xf32>
      %41 = vector.broadcast %35 : vector<1x32x1xf32> to vector<1x32x512xf32>
      %42 = arith.mulf %40, %41 : vector<1x32x512xf32>
      %c0_41 = arith.constant 0 : index
      %c0_42 = arith.constant 0 : index
      %43 = arith.index_cast %38 : i32 to index
      %44 = vector.load %arg5[%c0_41, %c0_42, %43] : memref<1x32x4096xf32, #tpu.memory_space<vmem>>, vector<1x32x512xf32>
      tpu.vector_store %arg5[%c0_41, %c0_42, %43], %42 {strides = array<i32>} : memref<1x32x4096xf32, #tpu.memory_space<vmem>>, vector<1x32x512xf32>,
    }
    %c8_i32_38 = arith.constant 8 : i32
    return
  }
  func.func @transform_0(%arg0: i32) -> (i32, i32, i32) {
    %c0_i32 = arith.constant 0 : i32
    %c0_i32_0 = arith.constant 0 : i32
    %c0_i32_1 = arith.constant 0 : i32
    return %arg0, %c0_i32, %c0_i32_0 : i32, i32, i32
  }
  func.func @transform_1(%arg0: i32) -> (i32, i32) {
    %c0_i32 = arith.constant 0 : i32
    %c0_i32_0 = arith.constant 0 : i32
    %c0_i32_1 = arith.constant 0 : i32
    return %c0_i32, %c0_i32_0 : i32, i32
  }
  func.func @transform_2(%arg0: i32) -> (i32, i32) {
    %c0_i32 = arith.constant 0 : i32
    %c0_i32_0 = arith.constant 0 : i32
    %c0_i32_1 = arith.constant 0 : i32
    return %c0_i32, %c0_i32_0 : i32, i32
  }
  func.func @transform_3(%arg0: i32) -> (i32, i32) {
    %c0_i32 = arith.constant 0 : i32
    %c0_i32_0 = arith.constant 0 : i32
    %c0_i32_1 = arith.constant 0 : i32
    return %c0_i32, %c0_i32_0 : i32, i32
  }
  func.func @transform_4(%arg0: i32) -> (i32, i32, i32) {
    %c0_i32 = arith.constant 0 : i32
    %c0_i32_0 = arith.constant 0 : i32
    %c0_i32_1 = arith.constant 0 : i32
    return %arg0, %c0_i32, %c0_i32_0 : i32, i32, i32
  }
}

</mosaic_0001>

<llo_original>
// kernel: msa_forward.1
$region0: #{msa_forward.1}
  #allocation0 [shape = 'u32[]', space=smem, size = 0x4, offset = 0x4, fixed_abs, tag = 'smem constant byte address 0x4 - core index']
  #allocation1 [shape = 'u32[144,128]{1,0:T(1,128)}', space=vmem, size = 0x12000, scoped, tag = 'internal scratch']
  #allocation2 [shape = 'f32[1,32,1]{2,1,0:T(8,128)}', space=vmem, size = 0x4000, scoped, tag = 'scratch operand']
  %s0 = inlined_call_operand.vmem [shape: f32[2,32,4096], index: 0, kind: input, shape index: {}]
  %s1 = inlined_call_operand.vmem [shape: f32[4,4096], index: 1, kind: input, shape index: {}]
  %s2 = inlined_call_operand.vmem [shape: f32[32,8], index: 2, kind: input, shape index: {}]
  %s3 = inlined_call_operand.vmem [shape: f32[32,8], index: 3, kind: input, shape index: {}]
  %s4 = inlined_call_operand.vmem [shape: f32[2,32,4096], index: 4, kind: output, shape index: {}]
  %s5 = sld [smem:[#allocation0]]
  $region84: #{msa_forward.1} parent=0
    _
  %s7 = ssub.s32 1, %s5
  %s8 = scalar_select 0, %s7, %s5
  loop: start=0, step=1, limit=4
  $region2: #{msa_forward.1} parent=0 // loop_pre_header
    _
  $region3: #{msa_forward.1} parent=0 // loop_header
    %s10 = sphi 0, %s14
    %p11 = scmp.ge.s32.totalorder %s10, 4
    %s20 = sphi 0, %s22
    %s23 = sphi 0, %s20
    %s24 = sphi 0, %s23
    %s40 = sphi 0, %s24
    %s44 = sphi 0, %s44
    %s46 = sphi 0, %s44
    %s47 = sphi 0, %s46
    %s61 = sphi 0, %s47
    %s65 = sphi 0, %s65
    %s67 = sphi 0, %s65
    %s68 = sphi 0, %s67
    %s82 = sphi 0, %s68
    %s86 = sphi 0, %s86
    %s88 = sphi 0, %s86
    %s89 = sphi 0, %s88
    %s103 = sphi 0, %s89
    %s109 = sphi 0, %s111
    %s112 = sphi 0, %s109
    %s113 = sphi 0, %s112
    %s129 = sphi 0, %s113
  $region4: #{msa_forward.1} parent=0 // loop_header_branch
    %13 = sbr.rel (%p11) target = $region8
  $region5: #{msa_forward.1} parent=0 // loop_body
    %s15 = ssub.s32 %s10, 1
    %s16 = ssub.s32 %s10, 2
    %s17 = sadd.s32 %s10, 1
    %s18 = ssub.s32 %s10, %s17
    %p19 = scmp.eq.s32.totalorder %s18, 0
    %s21 = sadd.s32 %s20, 1
    %s22 = scalar_select %p19, %s20, %s21
    %p25 = pneg %p19
    %p26 = scmp.eq.s32.totalorder %s10, 1
    %p27 = por %p25, %p26
    %p28 = scmp.ne.s32.totalorder %s20, %s23
    %p29 = scmp.eq.s32.totalorder %s10, 0
    %p30 = por %p28, %p29
    %p31 = scmp.ne.s32.totalorder %s20, %s23
    %p32 = scmp.eq.s32.totalorder %s15, 1
    %p33 = por %p31, %p32
    %p34 = scmp.ne.s32.totalorder %s23, %s24
    %p35 = scmp.eq.s32.totalorder %s15, 0
    %p36 = por %p34, %p35
    %p37 = scmp.ne.s32.totalorder %s23, %s24
    %p38 = scmp.eq.s32.totalorder %s16, 1
    %p39 = por %p37, %p38
    %p41 = scmp.ne.s32.totalorder %s24, %s40
    %p42 = scmp.eq.s32.totalorder %s16, 0
    %p43 = por %p41, %p42
    %s45 = sadd.s32 %s44, 1
    %p48 = scmp.eq.s32.totalorder %s10, 1
    %p49 = scmp.ne.s32.totalorder %s44, %s46
    %p50 = scmp.eq.s32.totalorder %s10, 0
    %p51 = por %p49, %p50
    %p52 = scmp.ne.s32.totalorder %s44, %s46
    %p53 = scmp.eq.s32.totalorder %s15, 1
    %p54 = por %p52, %p53
    %p55 = scmp.ne.s32.totalorder %s46, %s47
    %p56 = scmp.eq.s32.totalorder %s15, 0
    %p57 = por %p55, %p56
    %p58 = scmp.ne.s32.totalorder %s46, %s47
    %p59 = scmp.eq.s32.totalorder %s16, 1
    %p60 = por %p58, %p59
    %p62 = scmp.ne.s32.totalorder %s47, %s61
    %p63 = scmp.eq.s32.totalorder %s16, 0
    %p64 = por %p62, %p63
    %s66 = sadd.s32 %s65, 1
    %p69 = scmp.eq.s32.totalorder %s10, 1
    %p70 = scmp.ne.s32.totalorder %s65, %s67
    %p71 = scmp.eq.s32.totalorder %s10, 0
    %p72 = por %p70, %p71
    %p73 = scmp.ne.s32.totalorder %s65, %s67
    %p74 = scmp.eq.s32.totalorder %s15, 1
    %p75 = por %p73, %p74
    %p76 = scmp.ne.s32.totalorder %s67, %s68
    %p77 = scmp.eq.s32.totalorder %s15, 0
    %p78 = por %p76, %p77
    %p79 = scmp.ne.s32.totalorder %s67, %s68
    %p80 = scmp.eq.s32.totalorder %s16, 1
    %p81 = por %p79, %p80
    %p83 = scmp.ne.s32.totalorder %s68, %s82
    %p84 = scmp.eq.s32.totalorder %s16, 0
    %p85 = por %p83, %p84
    %s87 = sadd.s32 %s86, 1
    %p90 = scmp.eq.s32.totalorder %s10, 1
    %p91 = scmp.ne.s32.totalorder %s86, %s88
    %p92 = scmp.eq.s32.totalorder %s10, 0
    %p93 = por %p91, %p92
    %p94 = scmp.ne.s32.totalorder %s86, %s88
    %p95 = scmp.eq.s32.totalorder %s15, 1
    %p96 = por %p94, %p95
    %p97 = scmp.ne.s32.totalorder %s88, %s89
    %p98 = scmp.eq.s32.totalorder %s15, 0
    %p99 = por %p97, %p98
    %p100 = scmp.ne.s32.totalorder %s88, %s89
    %p101 = scmp.eq.s32.totalorder %s16, 1
    %p102 = por %p100, %p101
    %p104 = scmp.ne.s32.totalorder %s89, %s103
    %p105 = scmp.eq.s32.totalorder %s16, 0
    %p106 = por %p104, %p105
    %s107 = ssub.s32 %s10, %s17
    %p108 = scmp.eq.s32.totalorder %s107, 0
    %s110 = sadd.s32 %s109, 1
    %s111 = scalar_select %p108, %s109, %s110
    %p114 = pneg %p108
    %p115 = scmp.eq.s32.totalorder %s10, 1
    %p116 = por %p114, %p115
    %p117 = scmp.ne.s32.totalorder %s109, %s112
    %p118 = scmp.eq.s32.totalorder %s10, 0
    %p119 = por %p117, %p118
    %p120 = scmp.ne.s32.totalorder %s109, %s112
    %p121 = scmp.eq.s32.totalorder %s15, 1
    %p122 = por %p120, %p121
    %p123 = scmp.ne.s32.totalorder %s112, %s113
    %p124 = scmp.eq.s32.totalorder %s15, 0
    %p125 = por %p123, %p124
    %p126 = scmp.ne.s32.totalorder %s112, %s113
    %p127 = scmp.eq.s32.totalorder %s16, 1
    %p128 = por %p126, %p127
    %p130 = scmp.ne.s32.totalorder %s113, %s129
    %p131 = scmp.eq.s32.totalorder %s16, 0
    %p132 = por %p130, %p131
    %p133 = scmp.le.s32.totalorder 1, %s10
    %p134 = scmp.lt.s32.totalorder %s10, 3
    %p135 = pnand %p133, %p134
    %p136 = pneg %p135
    // Predicated region
    $region9: #{msa_forward.1} parent=5 // pred_check
      _
    $region10: #{msa_forward.1} parent=5 // pred_check_branch
      %138 = sbr.rel (%p135) target = $region12
    $region11: #{msa_forward.1} parent=5 // pred_region
      %s139 = ssub.s32 %s10, 1
      // Predicated region
      $region13: #{msa_forward.1} parent=11 // pred_check
        %p140 = pneg %p57
      $region14: #{msa_forward.1} parent=11 // pred_check_branch
        %142 = sbr.rel (%p140) target = $region16
      $region15: #{msa_forward.1} parent=11 // pred_region
        _
      $region16: #{msa_forward.1} parent=11 // pred_fallthru
        _
      // Predicated region
      $region17: #{msa_forward.1} parent=11 // pred_check
        %p143 = pneg %p78
      $region18: #{msa_forward.1} parent=11 // pred_check_branch
        %145 = sbr.rel (%p143) target = $region20
      $region19: #{msa_forward.1} parent=11 // pred_region
        _
      $region20: #{msa_forward.1} parent=11 // pred_fallthru
        _
      // Predicated region
      $region21: #{msa_forward.1} parent=11 // pred_check
        %p146 = pneg %p99
      $region22: #{msa_forward.1} parent=11 // pred_check_branch
        %148 = sbr.rel (%p146) target = $region24
      $region23: #{msa_forward.1} parent=11 // pred_region
        _
      $region24: #{msa_forward.1} parent=11 // pred_fallthru
        _
    $region12: #{msa_forward.1} parent=5 // pred_fallthru
      _
    %p149 = scmp.lt.s32.totalorder %s10, 2
    // Predicated region
    $region25: #{msa_forward.1} parent=5 // pred_check
      %p150 = pneg %p149
    $region26: #{msa_forward.1} parent=5 // pred_check_branch
      %152 = sbr.rel (%p150) target = $region28
    $region27: #{msa_forward.1} parent=5 // pred_region
      // Predicated region
      $region29: #{msa_forward.1} parent=27 // pred_check
        %p153 = pneg %p30
      $region30: #{msa_forward.1} parent=27 // pred_check_branch
        %155 = sbr.rel (%p153) target = $region32
      $region31: #{msa_forward.1} parent=27 // pred_region
        %p156 = scmp.lt.s32.totalorder %s10, 1
        %s157 = scalar_select %p156, %s10, 1
        %s158 = smul.addr %s157, 128
        %s159 = smul.addr %s158, 8
        %s160 = scalar_lea.vmem %s0, %s159
      $region32: #{msa_forward.1} parent=27 // pred_fallthru
        _
    $region28: #{msa_forward.1} parent=5 // pred_fallthru
      _
    %p161 = scmp.le.s32.totalorder 1, %s10
    %p162 = scmp.lt.s32.totalorder %s10, 3
    %p163 = pnand %p161, %p162
    %p164 = pneg %p163
    // Predicated region
    $region33: #{msa_forward.1} parent=5 // pred_check
      _
    $region34: #{msa_forward.1} parent=5 // pred_check_branch
      %166 = sbr.rel (%p163) target = $region36
    $region35: #{msa_forward.1} parent=5 // pred_region
      %s167 = ssub.s32 %s10, 1
      %p168 = scmp.lt.s32.totalorder %s15, 1
      %s169 = scalar_select %p168, %s15, 1
      %s170 = smul.addr %s169, 128
      %s171 = smul.addr %s170, 8
      %s172 = scalar_lea.vmem %s0, %s171
      %p173 = pneg %p36
      %p174 = pneg %p33
      %p175 = pneg %p57
      %p176 = pneg %p54
      %p177 = pneg %p78
      %p178 = pneg %p75
      %p179 = pneg %p99
      %p180 = pneg %p96
      %p181 = pneg %p125
      %p182 = pneg %p122
      %p183 = scmp.lt.s32.totalorder %s15, 1
      %s184 = scalar_select %p183, %s15, 1
      %s185 = smul.addr %s184, 128
      %s186 = smul.addr %s185, 8
      %s187 = scalar_lea.vmem %s4, %s186
      %p188 = scmp.lt.s32.totalorder %s15, 1
      %s189 = scalar_select %p188, %s15, 1
      %s190 = smul.addr %s189, 128
      %s191 = smul.addr %s190, 8
      %s192 = scalar_lea.vmem %s0, %s191
      %p193 = scmp.lt.s32.totalorder %s15, 1
      %s194 = scalar_select %p193, %s15, 1
      %s195 = smul.addr %s194, 128
      %s196 = smul.addr %s195, 8
      %s197 = scalar_lea.vmem %s4, %s196
      loop: start=0, step=1, limit=8
      $region37: #{msa_forward.1} parent=35 // loop_pre_header
        _
      $region38: #{msa_forward.1} parent=35 // loop_header
        %s199 = sphi 0, %s203
        %p200 = scmp.ge.s32.totalorder %s199, 8
        %v204 = vphi 0.0, %v247
      $region39: #{msa_forward.1} parent=35 // loop_header_branch
        %202 = sbr.rel (%p200) target = $region43
      $region40: #{msa_forward.1} parent=35 // loop_body
        %s205 = smul.u32 %s199, 512
        %s206 = sshra.s32 %s205, 7
        %s207 = sand.u32 %s205, 127
        %s208 = smul.addr %s206, 8
        %s209 = scalar_lea.vmem %s192, %s208
        %v210 = vld [vmem:[%s209] sm:$0xff]
        %v211 = vld [vmem:[%s209 + $0x8] sm:$0xff]
        %v212 = vld [vmem:[%s209 + $0x10] sm:$0xff]
        %v213 = vld [vmem:[%s209 + $0x18] sm:$0xff]
        %s214 = smul.addr %s206, 4
        %s215 = scalar_lea.vmem %s1, %s214
        %v216 = vld [vmem:[%s215] ss:$4 sm:$0xf]
        %v218 = vlaneseq
        %v219 = vshrl.u32 %v218, 7
        %v220 = vsub.s32 0, %v219
        %v221 = vrot.slane %v216, %v220
        %v222 = vlaneseq
        %v223 = vshrl.u32 %v222, 7
        %v224 = vsub.s32 1, %v223
        %v225 = vrot.slane %v216, %v224
        %v226 = vlaneseq
        %v227 = vshrl.u32 %v226, 7
        %v228 = vsub.s32 2, %v227
        %v229 = vrot.slane %v216, %v228
        %v230 = vlaneseq
        %v231 = vshrl.u32 %v230, 7
        %v232 = vsub.s32 3, %v231
        %v233 = vrot.slane %v216, %v232
        %v238 = vmul.f32 %v210, %v221
        %v239 = vmul.f32 %v211, %v225
        %v240 = vmul.f32 %v212, %v229
        %v241 = vmul.f32 %v213, %v233
        %v242 = vadd.f32 %v238, %v239
        %v243 = vadd.f32 %v242, %v240
        %v244 = vadd.f32 %v243, %v241
        %245 = vadd.xlane.f32.xlu0 %v244
        %v246 = vpop.xlane.xlu0 %245
        %v247 = vadd.f32 %v204, %v246
      $region41: #{msa_forward.1} parent=35 // loop_footer
        %s203 = sadd.s32 1, %s199
      $region42: #{msa_forward.1} parent=35 // loop_footer_branch
        %198 = sbr.rel target = $region38
      $region43: #{msa_forward.1} parent=35 // loop_exit
        _
      %vm248 = vcmask 7168
      %249 = vst.msk [vmem:[#allocation2] sm:$0xff] %vm248, %v204
      loop: start=0, step=1, limit=8
      $region44: #{msa_forward.1} parent=35 // loop_pre_header
        _
      $region45: #{msa_forward.1} parent=35 // loop_header
        %s251 = sphi 0, %s255
        %p252 = scmp.ge.s32.totalorder %s251, 8
        %v256 = vphi 0.0, %v300
      $region46: #{msa_forward.1} parent=35 // loop_header_branch
        %254 = sbr.rel (%p252) target = $region50
      $region47: #{msa_forward.1} parent=35 // loop_body
        %s257 = smul.u32 %s251, 512
        %s258 = sshra.s32 %s257, 7
        %s259 = sand.u32 %s257, 127
        %s260 = smul.addr %s258, 8
        %s261 = scalar_lea.vmem %s192, %s260
        %v262 = vld [vmem:[%s261 + $0x100] sm:$0xff]
        %v263 = vld [vmem:[%s261 + $0x108] sm:$0xff]
        %v264 = vld [vmem:[%s261 + $0x110] sm:$0xff]
        %v265 = vld [vmem:[%s261 + $0x118] sm:$0xff]
        %s266 = smul.addr %s258, 4
        %s267 = scalar_lea.vmem %s1, %s266
        %s268 = scalar_lea.vmem %s267, 1
        %v269 = vld [vmem:[%s268] ss:$4 sm:$0xf]
        %v271 = vlaneseq
        %v272 = vshrl.u32 %v271, 7
        %v273 = vsub.s32 0, %v272
        %v274 = vrot.slane %v269, %v273
        %v275 = vlaneseq
        %v276 = vshrl.u32 %v275, 7
        %v277 = vsub.s32 1, %v276
        %v278 = vrot.slane %v269, %v277
        %v279 = vlaneseq
        %v280 = vshrl.u32 %v279, 7
        %v281 = vsub.s32 2, %v280
        %v282 = vrot.slane %v269, %v281
        %v283 = vlaneseq
        %v284 = vshrl.u32 %v283, 7
        %v285 = vsub.s32 3, %v284
        %v286 = vrot.slane %v269, %v285
        %v291 = vmul.f32 %v262, %v274
        %v292 = vmul.f32 %v263, %v278
        %v293 = vmul.f32 %v264, %v282
        %v294 = vmul.f32 %v265, %v286
        %v295 = vadd.f32 %v291, %v292
        %v296 = vadd.f32 %v295, %v293
        %v297 = vadd.f32 %v296, %v294
        %298 = vadd.xlane.f32.xlu0 %v297
        %v299 = vpop.xlane.xlu0 %298
        %v300 = vadd.f32 %v256, %v299
      $region48: #{msa_forward.1} parent=35 // loop_footer
        %s255 = sadd.s32 1, %s251
      $region49: #{msa_forward.1} parent=35 // loop_footer_branch
        %250 = sbr.rel target = $region45
      $region50: #{msa_forward.1} parent=35 // loop_exit
        _
      %301 = vst.msk [vmem:[#allocation2 + $0x8] sm:$0xff] %vm248, %v256
      loop: start=0, step=1, limit=8
      $region51: #{msa_forward.1} parent=35 // loop_pre_header
        _
      $region52: #{msa_forward.1} parent=35 // loop_header
        %s303 = sphi 0, %s307
        %p304 = scmp.ge.s32.totalorder %s303, 8
        %v308 = vphi 0.0, %v352
      $region53: #{msa_forward.1} parent=35 // loop_header_branch
        %306 = sbr.rel (%p304) target = $region57
      $region54: #{msa_forward.1} parent=35 // loop_body
        %s309 = smul.u32 %s303, 512
        %s310 = sshra.s32 %s309, 7
        %s311 = sand.u32 %s309, 127
        %s312 = smul.addr %s310, 8
        %s313 = scalar_lea.vmem %s192, %s312
        %v314 = vld [vmem:[%s313 + $0x200] sm:$0xff]
        %v315 = vld [vmem:[%s313 + $0x208] sm:$0xff]
        %v316 = vld [vmem:[%s313 + $0x210] sm:$0xff]
        %v317 = vld [vmem:[%s313 + $0x218] sm:$0xff]
        %s318 = smul.addr %s310, 4
        %s319 = scalar_lea.vmem %s1, %s318
        %s320 = scalar_lea.vmem %s319, 2
        %v321 = vld [vmem:[%s320] ss:$4 sm:$0xf]
        %v323 = vlaneseq
        %v324 = vshrl.u32 %v323, 7
        %v325 = vsub.s32 0, %v324
        %v326 = vrot.slane %v321, %v325
        %v327 = vlaneseq
        %v328 = vshrl.u32 %v327, 7
        %v329 = vsub.s32 1, %v328
        %v330 = vrot.slane %v321, %v329
        %v331 = vlaneseq
        %v332 = vshrl.u32 %v331, 7
        %v333 = vsub.s32 2, %v332
        %v334 = vrot.slane %v321, %v333
        %v335 = vlaneseq
        %v336 = vshrl.u32 %v335, 7
        %v337 = vsub.s32 3, %v336
        %v338 = vrot.slane %v321, %v337
        %v343 = vmul.f32 %v314, %v326
        %v344 = vmul.f32 %v315, %v330
        %v345 = vmul.f32 %v316, %v334
        %v346 = vmul.f32 %v317, %v338
        %v347 = vadd.f32 %v343, %v344
        %v348 = vadd.f32 %v347, %v345
        %v349 = vadd.f32 %v348, %v346
        %350 = vadd.xlane.f32.xlu0 %v349
        %v351 = vpop.xlane.xlu0 %350
        %v352 = vadd.f32 %v308, %v351
      $region55: #{msa_forward.1} parent=35 // loop_footer
        %s307 = sadd.s32 1, %s303
      $region56: #{msa_forward.1} parent=35 // loop_footer_branch
        %302 = sbr.rel target = $region52
      $region57: #{msa_forward.1} parent=35 // loop_exit
        _
      %353 = vst.msk [vmem:[#allocation2 + $0x10] sm:$0xff] %vm248, %v308
      loop: start=0, step=1, limit=8
      $region58: #{msa_forward.1} parent=35 // loop_pre_header
        _
      $region59: #{msa_forward.1} parent=35 // loop_header
        %s355 = sphi 0, %s359
        %p356 = scmp.ge.s32.totalorder %s355, 8
        %v360 = vphi 0.0, %v404
      $region60: #{msa_forward.1} parent=35 // loop_header_branch
        %358 = sbr.rel (%p356) target = $region64
      $region61: #{msa_forward.1} parent=35 // loop_body
        %s361 = smul.u32 %s355, 512
        %s362 = sshra.s32 %s361, 7
        %s363 = sand.u32 %s361, 127
        %s364 = smul.addr %s362, 8
        %s365 = scalar_lea.vmem %s192, %s364
        %v366 = vld [vmem:[%s365 + $0x300] sm:$0xff]
        %v367 = vld [vmem:[%s365 + $0x308] sm:$0xff]
        %v368 = vld [vmem:[%s365 + $0x310] sm:$0xff]
        %v369 = vld [vmem:[%s365 + $0x318] sm:$0xff]
        %s370 = smul.addr %s362, 4
        %s371 = scalar_lea.vmem %s1, %s370
        %s372 = scalar_lea.vmem %s371, 3
        %v373 = vld [vmem:[%s372] ss:$4 sm:$0xf]
        %v375 = vlaneseq
        %v376 = vshrl.u32 %v375, 7
        %v377 = vsub.s32 0, %v376
        %v378 = vrot.slane %v373, %v377
        %v379 = vlaneseq
        %v380 = vshrl.u32 %v379, 7
        %v381 = vsub.s32 1, %v380
        %v382 = vrot.slane %v373, %v381
        %v383 = vlaneseq
        %v384 = vshrl.u32 %v383, 7
        %v385 = vsub.s32 2, %v384
        %v386 = vrot.slane %v373, %v385
        %v387 = vlaneseq
        %v388 = vshrl.u32 %v387, 7
        %v389 = vsub.s32 3, %v388
        %v390 = vrot.slane %v373, %v389
        %v395 = vmul.f32 %v366, %v378
        %v396 = vmul.f32 %v367, %v382
        %v397 = vmul.f32 %v368, %v386
        %v398 = vmul.f32 %v369, %v390
        %v399 = vadd.f32 %v395, %v396
        %v400 = vadd.f32 %v399, %v397
        %v401 = vadd.f32 %v400, %v398
        %402 = vadd.xlane.f32.xlu0 %v401
        %v403 = vpop.xlane.xlu0 %402
        %v404 = vadd.f32 %v360, %v403
      $region62: #{msa_forward.1} parent=35 // loop_footer
        %s359 = sadd.s32 1, %s355
      $region63: #{msa_forward.1} parent=35 // loop_footer_branch
        %354 = sbr.rel target = $region59
      $region64: #{msa_forward.1} parent=35 // loop_exit
        _
      %405 = vst.msk [vmem:[#allocation2 + $0x18] sm:$0xff] %vm248, %v360
      %v406 = vld [vmem:[#allocation2] sm:$0xff]
      %v407 = vld [vmem:[#allocation2 + $0x8] sm:$0xff]
      %v408 = vld [vmem:[#allocation2 + $0x10] sm:$0xff]
      %v409 = vld [vmem:[#allocation2 + $0x18] sm:$0xff]
      %v410 = vld [vmem:[%s2] sm:$0xff]
      %v411 = vld [vmem:[%s2 + $0x8] sm:$0xff]
      %v412 = vld [vmem:[%s2 + $0x10] sm:$0xff]
      %v413 = vld [vmem:[%s2 + $0x18] sm:$0xff]
      %v414 = vld [vmem:[%s3] sm:$0xff]
      %v415 = vld [vmem:[%s3 + $0x8] sm:$0xff]
      %v416 = vld [vmem:[%s3 + $0x10] sm:$0xff]
      %v417 = vld [vmem:[%s3 + $0x18] sm:$0xff]
      %419 = vset.pattern.permute.xlu0 0
      %420 = vperm.xlu0 %419, %v406
      %v421 = vpop.permute.xlu0 %420
      %424 = vset.pattern.permute.xlu0 0
      %425 = vperm.xlu0 %424, %v407
      %v426 = vpop.permute.xlu0 %425
      %429 = vset.pattern.permute.xlu0 0
      %430 = vperm.xlu0 %429, %v408
      %v431 = vpop.permute.xlu0 %430
      %434 = vset.pattern.permute.xlu0 0
      %435 = vperm.xlu0 %434, %v409
      %v436 = vpop.permute.xlu0 %435
      %v438 = vmul.f32 %v410, %v421
      %v439 = vmul.f32 %v411, %v426
      %v440 = vmul.f32 %v412, %v431
      %v441 = vmul.f32 %v413, %v436
      %vm442 = vcmask 64512
      %v443 = vsel %vm442, %v438, 0.0
      %v444 = vsel %vm442, %v439, 0.0
      %v445 = vadd.f32 %v443, %v444
      %v446 = vsel %vm442, %v440, 0.0
      %v447 = vadd.f32 %v445, %v446
      %v448 = vsel %vm442, %v441, 0.0
      %v449 = vadd.f32 %v447, %v448
      %v450 = vrot.slane %v449, 4
      %v451 = vadd.f32 %v449, %v450
      %v452 = vrot.slane %v451, 2
      %v453 = vadd.f32 %v451, %v452
      %v454 = vrot.slane %v453, 1
      %v455 = vadd.f32 %v453, %v454
      %v456 = vmax.f32 %v455, 0.0
      %v457 = vmul.f32 %v414, %v456
      %v458 = vmul.f32 %v415, %v456
      %v459 = vmul.f32 %v416, %v456
      %v460 = vmul.f32 %v417, %v456
      %v461 = vsel %vm442, %v457, 0.0
      %462 = vadd.xlane.f32.xlu0 %v461
      %v463 = vpop.xlane.xlu0 %462
      %v464 = vsel %vm442, %v458, 0.0
      %465 = vadd.xlane.f32.xlu0 %v464
      %v466 = vpop.xlane.xlu0 %465
      %v467 = vsel %vm442, %v459, 0.0
      %468 = vadd.xlane.f32.xlu0 %v467
      %v469 = vpop.xlane.xlu0 %468
      %v470 = vsel %vm442, %v460, 0.0
      %471 = vadd.xlane.f32.xlu0 %v470
      %v472 = vpop.xlane.xlu0 %471
      %v473 = vxor.u32 %v463, 2147483648
      %v474 = vxor.u32 %v466, 2147483648
      %v475 = vxor.u32 %v469, 2147483648
      %v476 = vxor.u32 %v472, 2147483648
      %v477 = vmul.f32 %v473, 1.442695
      %v478 = vpow.pop %v477
      %v479 = vmul.f32 %v474, 1.442695
      %v480 = vpow.pop %v479
      %v481 = vmul.f32 %v475, 1.442695
      %v482 = vpow.pop %v481
      %v483 = vmul.f32 %v476, 1.442695
      %v484 = vpow.pop %v483
      %v485 = vadd.f32 %v478, 1.0
      %v486 = vadd.f32 %v480, 1.0
      %v487 = vadd.f32 %v482, 1.0
      %v488 = vadd.f32 %v484, 1.0
      %v489 = vrcp.pop %v485
      %v490 = vmul.f32 1.0, %v489
      %v491 = vrcp.pop %v486
      %v492 = vmul.f32 1.0, %v491
      %v493 = vrcp.pop %v487
      %v494 = vmul.f32 1.0, %v493
      %v495 = vrcp.pop %v488
      %v496 = vmul.f32 1.0, %v495
      loop: start=0, step=1, limit=8
      $region65: #{msa_forward.1} parent=35 // loop_pre_header
        _
      $region66: #{msa_forward.1} parent=35 // loop_header
        %s498 = sphi 0, %s502
        %p499 = scmp.ge.s32.totalorder %s498, 8
      $region67: #{msa_forward.1} parent=35 // loop_header_branch
        %501 = sbr.rel (%p499) target = $region71
      $region68: #{msa_forward.1} parent=35 // loop_body
        %s503 = smul.u32 %s498, 512
        %s504 = sshra.s32 %s503, 7
        %s505 = sand.u32 %s503, 127
        %s506 = smul.addr %s504, 8
        %s507 = scalar_lea.vmem %s192, %s506
        %v508 = vld [vmem:[%s507] sm:$0xff]
        %v509 = vld [vmem:[%s507 + $0x8] sm:$0xff]
        %v510 = vld [vmem:[%s507 + $0x10] sm:$0xff]
        %v511 = vld [vmem:[%s507 + $0x18] sm:$0xff]
        %v512 = vld [vmem:[%s507 + $0x100] sm:$0xff]
        %v513 = vld [vmem:[%s507 + $0x108] sm:$0xff]
        %v514 = vld [vmem:[%s507 + $0x110] sm:$0xff]
        %v515 = vld [vmem:[%s507 + $0x118] sm:$0xff]
        %v516 = vld [vmem:[%s507 + $0x200] sm:$0xff]
        %v517 = vld [vmem:[%s507 + $0x208] sm:$0xff]
        %v518 = vld [vmem:[%s507 + $0x210] sm:$0xff]
        %v519 = vld [vmem:[%s507 + $0x218] sm:$0xff]
        %v520 = vld [vmem:[%s507 + $0x300] sm:$0xff]
        %v521 = vld [vmem:[%s507 + $0x308] sm:$0xff]
        %v522 = vld [vmem:[%s507 + $0x310] sm:$0xff]
        %v523 = vld [vmem:[%s507 + $0x318] sm:$0xff]
        %v524 = vmul.f32 %v508, %v490
        %v525 = vmul.f32 %v509, %v490
        %v526 = vmul.f32 %v510, %v490
        %v527 = vmul.f32 %v511, %v490
        %v528 = vmul.f32 %v512, %v492
        %v529 = vmul.f32 %v513, %v492
        %v530 = vmul.f32 %v514, %v492
        %v531 = vmul.f32 %v515, %v492
        %v532 = vmul.f32 %v516, %v494
        %v533 = vmul.f32 %v517, %v494
        %v534 = vmul.f32 %v518, %v494
        %v535 = vmul.f32 %v519, %v494
        %v536 = vmul.f32 %v520, %v496
        %v537 = vmul.f32 %v521, %v496
        %v538 = vmul.f32 %v522, %v496
        %v539 = vmul.f32 %v523, %v496
        %s540 = smul.addr %s504, 8
        %s541 = scalar_lea.vmem %s197, %s540
        %542 = vst [vmem:[%s541] sm:$0xff] %v524
        %543 = vst [vmem:[%s541 + $0x8] sm:$0xff] %v525
        %544 = vst [vmem:[%s541 + $0x10] sm:$0xff] %v526
        %545 = vst [vmem:[%s541 + $0x18] sm:$0xff] %v527
        %546 = vst [vmem:[%s541 + $0x100] sm:$0xff] %v528
        %547 = vst [vmem:[%s541 + $0x108] sm:$0xff] %v529
        %548 = vst [vmem:[%s541 + $0x110] sm:$0xff] %v530
        %549 = vst [vmem:[%s541 + $0x118] sm:$0xff] %v531
        %550 = vst [vmem:[%s541 + $0x200] sm:$0xff] %v532
        %551 = vst [vmem:[%s541 + $0x208] sm:$0xff] %v533
        %552 = vst [vmem:[%s541 + $0x210] sm:$0xff] %v534
        %553 = vst [vmem:[%s541 + $0x218] sm:$0xff] %v535
        %554 = vst [vmem:[%s541 + $0x300] sm:$0xff] %v536
        %555 = vst [vmem:[%s541 + $0x308] sm:$0xff] %v537
        %556 = vst [vmem:[%s541 + $0x310] sm:$0xff] %v538
        %557 = vst [vmem:[%s541 + $0x318] sm:$0xff] %v539
      $region69: #{msa_forward.1} parent=35 // loop_footer
        %s502 = sadd.s32 1, %s498
      $region70: #{msa_forward.1} parent=35 // loop_footer_branch
        %497 = sbr.rel target = $region66
      $region71: #{msa_forward.1} parent=35 // loop_exit
        _
      %p558 = scmp.lt.s32.totalorder %s15, 1
      %s559 = scalar_select %p558, %s15, 1
      %s560 = smul.addr %s559, 128
      %s561 = smul.addr %s560, 8
      %s562 = scalar_lea.vmem %s4, %s561
      // Predicated region
      $region72: #{msa_forward.1} parent=35 // pred_check
        %p563 = pneg %p122
      $region73: #{msa_forward.1} parent=35 // pred_check_branch
        %565 = sbr.rel (%p563) target = $region75
      $region74: #{msa_forward.1} parent=35 // pred_region
        _
      $region75: #{msa_forward.1} parent=35 // pred_fallthru
        _
    $region36: #{msa_forward.1} parent=5 // pred_fallthru
      _
    %p566 = scmp.le.s32.totalorder 2, %s10
    // Predicated region
    $region76: #{msa_forward.1} parent=5 // pred_check
      %p567 = pneg %p566
    $region77: #{msa_forward.1} parent=5 // pred_check_branch
      %569 = sbr.rel (%p567) target = $region79
    $region78: #{msa_forward.1} parent=5 // pred_region
      %s570 = ssub.s32 %s10, 2
      // Predicated region
      $region80: #{msa_forward.1} parent=78 // pred_check
        %p571 = pneg %p128
      $region81: #{msa_forward.1} parent=78 // pred_check_branch
        %573 = sbr.rel (%p571) target = $region83
      $region82: #{msa_forward.1} parent=78 // pred_region
        %p574 = scmp.lt.s32.totalorder %s16, 1
        %s575 = scalar_select %p574, %s16, 1
        %s576 = smul.addr %s575, 128
        %s577 = smul.addr %s576, 8
        %s578 = scalar_lea.vmem %s4, %s577
      $region83: #{msa_forward.1} parent=78 // pred_fallthru
        _
    $region79: #{msa_forward.1} parent=5 // pred_fallthru
      _
  $region6: #{msa_forward.1} parent=0 // loop_footer
    %s14 = sadd.s32 1, %s10
  $region7: #{msa_forward.1} parent=0 // loop_footer_branch
    %9 = sbr.rel target = $region3
  $region8: #{msa_forward.1} parent=0 // loop_exit
    _

</llo_original>
